<compile_context>
chip_gen: v7x
topology: tpu7x:2x2x1
jax: 0.10.0
libtpu: 0.0.40
codegen_flags: <defaults>
</compile_context>

<pallas_src>
import functools

import jax
import jax.numpy as jnp
from jax import lax
from jax.experimental import pallas as pl
from jax.experimental.pallas import tpu as pltpu


# ----------------------------- sizes (scaled-down synthetic model) ----------
B = 2            # batch
C_FEAT = 384     # stands for 2048 (ResNet feature channels)
H = W = 8        # spatial size of the feature map (HW stands for 7*7=49)
D_EMB = 128      # stands for 2400 (joint embedding dim)
D_WORD = 64      # stands for 620 (word embedding dim)
T = 8            # caption length
N_LAYERS = 4     # SRU layers
N_MAX = 15       # WeldonPooling(15): top-15 + bottom-15
EPS = 1e-12      # l2-normalize epsilon (avoid 0-division NaNs)


def _pick_tile(dim, candidates):
    """Largest candidate that evenly divides `dim`.

    If nothing divides: use the full dim only when it is small (block == full dim
    is legal); otherwise fail loudly instead of silently blowing up VMEM with a
    full-width tile (perf-review opt #2)."""
    for c in candidates:
        if dim >= c and dim % c == 0:
            return c
    if dim <= min(candidates):
        return dim
    raise ValueError(
        f"dim {dim} has no aligned tile among {candidates}; pad it to a multiple "
        f"of {min(candidates)} (e.g. 2400 -> 2560) instead of using a full-width "
        f"tile.")


# ----------------------------- grouped matmul (+bias, optional l2norm) ------

def _matmul_bias_kernel(a_ref, w_ref, b_ref, o_ref, *acc, fuse_l2norm, eps):
    """One (tm, tn) output tile of  out[g] = A @ W[g] + bias[g]  (f32 accumulate).

    If no scratch is passed, the output block itself (f32, resident across the K
    sweep) is the accumulator (opt #3)."""
    kk = pl.program_id(3)
    acc_ref = acc[0] if acc else None

    @pl.when(kk == 0)
    def _():
        if acc_ref is not None:
            acc_ref[...] = jnp.zeros_like(acc_ref)
        else:
            o_ref[...] = jnp.zeros_like(o_ref)

    p = jnp.dot(a_ref[...], w_ref[0], preferred_element_type=jnp.float32)
    if acc_ref is not None:
        acc_ref[...] += p
    else:
        o_ref[0] += p

    @pl.when(kk == pl.num_programs(3) - 1)
    def _():
        base = acc_ref[...] if acc_ref is not None else o_ref[0]
        out = base + b_ref[0]                       # (tm, tn) + (1, tn)
        if fuse_l2norm:                             # static (python) branch
            ssq = jnp.sum(out * out, axis=-1, keepdims=True)
            out = out * lax.rsqrt(ssq + eps)
        o_ref[0] = out.astype(o_ref.dtype)


def matmul_bias(a, w, bias, *, fuse_l2norm=False, out_dtype=jnp.float32):
    """a: (M, K)   w: (G, K, N)   bias: (G, 1, N)   ->  (G, M, N).

    bf16 operands on the MXU, f32 accumulation, bounded 128-aligned tiles."""
    M, K = a.shape
    G, K2, N = w.shape
    assert K == K2 and bias.shape == (G, 1, N)

    tm = _pick_tile(M, (256, 128, 64, 32, 16, 8))
    tn = N if fuse_l2norm else _pick_tile(N, (512, 384, 256, 128))
    tk = _pick_tile(K, (512, 384, 256, 128))

    a = a.astype(jnp.bfloat16)
    w = w.astype(jnp.bfloat16)
    bias = bias.astype(jnp.float32)

    out_is_f32 = jnp.dtype(out_dtype) == jnp.dtype(jnp.float32)
    scratch = [] if out_is_f32 else [pltpu.VMEM((tm, tn), jnp.float32)]

    kernel = functools.partial(_matmul_bias_kernel,
                               fuse_l2norm=fuse_l2norm, eps=EPS)
    return pl.pallas_call(
        kernel,
        out_shape=jax.ShapeDtypeStruct((G, M, N), out_dtype),
        grid=(G, M // tm, N // tn, K // tk),
        in_specs=[pl.BlockSpec((tm, tk), lambda g, i, j, k: (i, k)),
                  pl.BlockSpec((1, tk, tn), lambda g, i, j, k: (g, k, j)),
                  pl.BlockSpec((1, 1, tn), lambda g, i, j, k: (g, 0, j))],
        out_specs=pl.BlockSpec((1, tm, tn), lambda g, i, j, k: (g, i, j)),
        scratch_shapes=scratch,
        compiler_params=pltpu.CompilerParams(
            dimension_semantics=("parallel", "parallel", "parallel", "arbitrary")),
    )(a, w, bias)


# ----------------------------- Weldon pooling (top-k + bottom-k over HW) ----

def _weldon_kernel(x_ref, o_ref, *, n_max, n_min):
    """Per (batch, channel-tile): mean of top-n_max + mean of bottom-n_min over HW.
    HW on sublanes, channels on lanes -> lane-dense output row.  The independent
    top/bottom selection chains are interleaved and fully unrolled so the XLU
    reduces of the two chains overlap (opt #7)."""
    x = x_ref[0].astype(jnp.float32)                  # (HW, TN)
    hw, tn = x.shape
    row = lax.broadcasted_iota(jnp.int32, (hw, tn), 0)
    NEG = jnp.float32(-3.0e38)
    POS = jnp.float32(3.0e38)
    zero = jnp.zeros((1, tn), jnp.float32)

    def take_max(xv):
        m = jnp.max(xv, axis=0, keepdims=True)
        first = jnp.min(jnp.where(xv == m, row, hw), axis=0, keepdims=True)
        return m, jnp.where(row == first, NEG, xv)

    def take_min(xv):
        m = jnp.min(xv, axis=0, keepdims=True)
        first = jnp.min(jnp.where(xv == m, row, hw), axis=0, keepdims=True)
        return m, jnp.where(row == first, POS, xv)

    n_common = min(n_max, n_min)

    def both_step(_, carry):
        xt, xb, at, ab = carry
        mt, xt = take_max(xt)
        mb, xb = take_min(xb)
        return xt, xb, at + mt, ab + mb

    xt, xb, acc_t, acc_b = lax.fori_loop(0, n_common, both_step,
                                         (x, x, zero, zero), unroll=True)

    def top_step(_, carry):
        xv, acc = carry
        m, xv = take_max(xv)
        return xv, acc + m

    def bot_step(_, carry):
        xv, acc = carry
        m, xv = take_min(xv)
        return xv, acc + m

    if n_max > n_common:
        xt, acc_t = lax.fori_loop(n_common, n_max, top_step, (xt, acc_t),
                                  unroll=True)
    if n_min > n_common:
        xb, acc_b = lax.fori_loop(n_common, n_min, bot_step, (xb, acc_b),
                                  unroll=True)

    o_ref[0] = acc_t * (1.0 / n_max) + acc_b * (1.0 / n_min)


def weldon_pool(x, n_max, n_min):
    """x: (B, HW, D) -> (B, D). Grid fully parallel over (batch, channel tiles)."""
    Bn, HW, D = x.shape
    n_max = min(n_max, HW)                            # guard: never sum sentinels
    n_min = min(n_min, HW)
    tn = _pick_tile(D, (512, 384, 256, 128))
    kernel = functools.partial(_weldon_kernel, n_max=n_max, n_min=n_min)
    out = pl.pallas_call(
        kernel,
        out_shape=jax.ShapeDtypeStruct((Bn, 1, D), jnp.float32),
        grid=(Bn, D // tn),
        in_specs=[pl.BlockSpec((1, HW, tn), lambda b, j: (b, 0, j))],
        out_specs=pl.BlockSpec((1, 1, tn), lambda b, j: (b, 0, j)),
        compiler_params=pltpu.CompilerParams(
            dimension_semantics=("parallel", "parallel")),
    )(x.astype(jnp.float32))
    return out.reshape(Bn, D)


# ----------------------------- SRU recurrence --------------------------------

def _sru_kernel(*refs, tc, skip_in_u):
    """SRU v1 cell over a chunk of `tc` timesteps and one D chunk.

    U comes in gate-major (k, tc, B, td) bf16 so gates are leading-axis slabs
    (lane-aligned).  Also tracks h[lengths-1] (the _select_last row) in a resident
    (B, td) f32 output so no separate (T, B, D) pass is needed afterwards."""
    if skip_in_u:
        lens_ref, u_ref, h_ref, hlast_ref, c_ref = refs
        x_ref = None
    else:
        lens_ref, u_ref, x_ref, h_ref, hlast_ref, c_ref = refs

    s = pl.program_id(1)                              # time-chunk index

    @pl.when(s == 0)
    def _():
        c_ref[...] = jnp.zeros_like(c_ref)
        hlast_ref[...] = jnp.zeros_like(hlast_ref)

    last_t = lens_ref[...] - 1                        # (B, 1) int32
    c = c_ref[...]                                    # (B, td) f32
    for t in range(tc):                               # static, fully unrolled
        u0 = u_ref[0, t].astype(jnp.float32)
        fg = jax.nn.sigmoid(u_ref[1, t].astype(jnp.float32))   # bias pre-folded
        rg = jax.nn.sigmoid(u_ref[2, t].astype(jnp.float32))   # bias pre-folded
        if skip_in_u:
            xs = u_ref[3, t].astype(jnp.float32)
        else:
            xs = x_ref[t].astype(jnp.float32)
        c = fg * c + (1.0 - fg) * u0
        ht = rg * jnp.tanh(c) + (1.0 - rg) * xs
        h_ref[t] = ht.astype(h_ref.dtype)
        hlast_ref[...] = jnp.where(last_t == (s * tc + t), ht, hlast_ref[...])
    c_ref[...] = c


def sru_recurrence(U, x_skip, lengths):
    """U: (G, T, B, D) bf16 gate-major projections (G=4: skip inside U, G=3: skip
    is x_skip).  Returns (h (T,B,D) bf16, h_last (B,D) f32)."""
    G, Tn, Bn, D = U.shape
    td = _pick_tile(D, (512, 384, 256, 128))          # D chunks -> "parallel" axis
    tc = _pick_tile(Tn, (8, 4, 2, 1))                 # timesteps per grid step
    skip_in_u = x_skip is None

    lens = lengths.reshape(Bn, 1).astype(jnp.int32)

    in_specs = [pl.BlockSpec((Bn, 1), lambda dj, s: (0, 0)),
                pl.BlockSpec((G, tc, Bn, td), lambda dj, s: (0, s, 0, dj))]
    args = [lens, U]
    if not skip_in_u:
        in_specs.append(pl.BlockSpec((tc, Bn, td), lambda dj, s: (s, 0, dj)))
        args.append(x_skip)

    kernel = functools.partial(_sru_kernel, tc=tc, skip_in_u=skip_in_u)
    h, h_last = pl.pallas_call(
        kernel,
        out_shape=(jax.ShapeDtypeStruct((Tn, Bn, D), jnp.bfloat16),
                   jax.ShapeDtypeStruct((Bn, D), jnp.float32)),
        grid=(D // td, Tn // tc),
        in_specs=in_specs,
        out_specs=(pl.BlockSpec((tc, Bn, td), lambda dj, s: (s, 0, dj)),
                   pl.BlockSpec((Bn, td), lambda dj, s: (0, dj))),
        scratch_shapes=[pltpu.VMEM((Bn, td), jnp.float32)],
        compiler_params=pltpu.CompilerParams(
            dimension_semantics=("parallel", "arbitrary")),
    )(*args)
    return h, h_last


# ----------------------------- L2-normalize (caption head tail) -------------

def _l2norm_kernel(x_ref, o_ref, *, eps):
    x = x_ref[...].astype(jnp.float32)
    ssq = jnp.sum(x * x, axis=-1, keepdims=True)
    o_ref[...] = x * lax.rsqrt(ssq + eps)


def l2_normalize(x):
    Bn, Dn = x.shape
    return pl.pallas_call(
        functools.partial(_l2norm_kernel, eps=EPS),
        out_shape=jax.ShapeDtypeStruct((Bn, Dn), jnp.float32),
        grid=(1,),
        in_specs=[pl.BlockSpec((Bn, Dn), lambda i: (0, 0))],
        out_specs=pl.BlockSpec((Bn, Dn), lambda i: (0, 0)),
    )(x.astype(jnp.float32))


# ----------------------------- model (glue + kernels) -----------------------

def init_params(key):
    ks = jax.random.split(key, 4 + 3 * N_LAYERS)
    s = 0.1
    params = {
        # weights stored grouped / gate-major so no runtime relayout is needed
        "spaconv_w": (s * jax.random.normal(ks[0], (1, C_FEAT, D_EMB))).astype(jnp.bfloat16),
        "spaconv_b": s * jax.random.normal(ks[1], (1, 1, D_EMB), jnp.float32),
        "fc_w": (s * jax.random.normal(ks[2], (1, D_EMB, D_EMB))).astype(jnp.bfloat16),
        "fc_b": s * jax.random.normal(ks[3], (1, 1, D_EMB), jnp.float32),
        "sru_w": [],       # (G, d_in, D_EMB) per layer
        "sru_bias": [],    # (G, 1, D_EMB) per layer: [0 | b_f | b_r | (0)]
    }
    for l in range(N_LAYERS):
        d_in = D_WORD if l == 0 else D_EMB
        g = 4 if d_in != D_EMB else 3     # SRU v1: extra skip projection iff dims differ
        w = s * jax.random.normal(ks[4 + 3 * l], (g, d_in, D_EMB), jnp.float32)
        bf = s * jax.random.normal(ks[5 + 3 * l], (D_EMB,), jnp.float32)
        br = s * jax.random.normal(ks[6 + 3 * l], (D_EMB,), jnp.float32)
        pieces = [jnp.zeros((D_EMB,), jnp.float32), bf, br]
        if g == 4:
            pieces.append(jnp.zeros((D_EMB,), jnp.float32))
        params["sru_w"].append(w.astype(jnp.bfloat16))
        params["sru_bias"].append(jnp.stack(pieces, axis=0).reshape(g, 1, D_EMB))
    return params


def joint_embedding_forward(params, imgs_feat, caps, lengths):
    # ---------------- image branch ----------------
    # imgs_feat is the (frozen) trunk's feature map in NHWC, so the 1x1 conv is a
    # plain matmul over the flattened spatial positions (no transpose pass).
    Bn, Hn, Wn, Cn = imgs_feat.shape
    feats = imgs_feat.reshape(Bn * Hn * Wn, Cn)
    spa = matmul_bias(feats, params["spaconv_w"], params["spaconv_b"])   # (1,BHW,D) f32
    spa = spa.reshape(Bn, Hn * Wn, D_EMB)
    pooled = weldon_pool(spa, N_MAX, N_MAX)              # (B, D_EMB)
    # dropout(p=0.5): identity at inference
    x_imgs = matmul_bias(pooled, params["fc_w"], params["fc_b"],
                         fuse_l2norm=True)               # fc + l2-normalize fused
    x_imgs = x_imgs.reshape(Bn, D_EMB)

    # ---------------- caption branch (4-layer SRU) ----------------
    # lengths must lie in [1, T]; out-of-range lengths give an all-zero row (same
    # as the mask-sum _select_last semantics).
    Bc, Tn, _ = caps.shape
    x = jnp.transpose(caps, (1, 0, 2)).astype(jnp.bfloat16)             # (T, B, D_WORD)
    h_last = None
    for l in range(N_LAYERS):
        Wl = params["sru_w"][l]
        g, d_in, _ = Wl.shape
        # forget/reset biases folded into the projection bias; U stays bf16 and
        # gate-major (g, T, B, D) so the recurrence reads lane-aligned slabs.
        U = matmul_bias(x.reshape(Tn * Bc, d_in), Wl, params["sru_bias"][l],
                        out_dtype=jnp.bfloat16)
        U = U.reshape(g, Tn, Bc, D_EMB)
        x, h_last = sru_recurrence(U, None if g == 4 else x, lengths)
        # rnn_dropout / dropout: identity at inference
    # _select_last already happened inside the last recurrence; only normalize.
    x_caps = l2_normalize(h_last)                        # (B, D_EMB)

    return x_imgs, x_caps


# ----------------------------- main ------------------------------------------

if __name__ == "__main__":
    key = jax.random.PRNGKey(0)
    kp, ki, kc = jax.random.split(key, 3)

    params = init_params(kp)
    imgs_feat = jax.random.normal(ki, (B, H, W, C_FEAT), jnp.float32)    # NHWC feature map
    caps = jax.random.normal(kc, (B, T, D_WORD), jnp.float32)            # word embeddings
    lengths = jnp.array([T, T - 3], dtype=jnp.int32)

    x_imgs, x_caps = joint_embedding_forward(params, imgs_feat, caps, lengths)
    jax.block_until_ready((x_imgs, x_caps))

    assert x_imgs.shape == (B, D_EMB) and x_caps.shape == (B, D_EMB)
    assert bool(jnp.all(jnp.isfinite(x_imgs))) and bool(jnp.all(jnp.isfinite(x_caps)))
    print("KERNEL_OK")
</pallas_src>

<mosaic_0001>
module attributes {stable_mosaic.version = 11 : i64} {
  func.func @_matmul_bias_kernel(%arg0: i32, %arg1: i32, %arg2: i32, %arg3: i32, %arg4: memref<128x384xbf16, #tpu.memory_space<vmem>>, %arg5: memref<1x384x128xbf16, #tpu.memory_space<vmem>>, %arg6: memref<1x1x128xf32, #tpu.memory_space<vmem>>, %arg7: memref<1x128x128xf32, #tpu.memory_space<vmem>>) attributes {dimension_semantics = [#tpu.dimension_semantics<parallel>, #tpu.dimension_semantics<parallel>, #tpu.dimension_semantics<parallel>, #tpu.dimension_semantics<arbitrary>], iteration_bounds = array<i64: 1, 1, 1, 1>, scalar_prefetch = 0 : i64, scratch_operands = 0 : i64, tpu.core_type = #tpu.core_type<tc>, window_params = [{transform_indices = @transform_0, window_bounds = array<i64: 128, 384>}, {transform_indices = @transform_1, window_bounds = array<i64: 1, 384, 128>}, {transform_indices = @transform_2, window_bounds = array<i64: 1, 1, 128>}, {transform_indices = @transform_3, window_bounds = array<i64: 1, 128, 128>}]} {
    %c0_i32 = arith.constant 0 : i32
    %0 = arith.cmpi eq, %arg3, %c0_i32 : i32
    %1 = arith.extui %0 : i1 to i32
    %c0_i32_0 = arith.constant 0 : i32
    %2 = arith.cmpi ne, %1, %c0_i32_0 : i32
    scf.if %2 {
      %cst_13 = arith.constant 0.000000e+00 : f32
      %16 = vector.broadcast %cst_13 : f32 to vector<1x128x128xf32>
      %c0_14 = arith.constant 0 : index
      %c0_15 = arith.constant 0 : index
      %c0_16 = arith.constant 0 : index
      %17 = vector.load %arg7[%c0_14, %c0_15, %c0_16] : memref<1x128x128xf32, #tpu.memory_space<vmem>>, vector<1x128x128xf32>
      tpu.vector_store %arg7[%c0_14, %c0_15, %c0_16], %16 {strides = array<i32>} : memref<1x128x128xf32, #tpu.memory_space<vmem>>, vector<1x128x128xf32>,
    } else {
    }
    %c0 = arith.constant 0 : index
    %c0_1 = arith.constant 0 : index
    %3 = vector.load %arg4[%c0, %c0_1] : memref<128x384xbf16, #tpu.memory_space<vmem>>, vector<128x384xbf16>
    %c0_2 = arith.constant 0 : index
    %c0_3 = arith.constant 0 : index
    %c0_4 = arith.constant 0 : index
    %4 = vector.load %arg5[%c0_2, %c0_3, %c0_4] : memref<1x384x128xbf16, #tpu.memory_space<vmem>>, vector<1x384x128xbf16>
    %5 = vector.shape_cast %4 : vector<1x384x128xbf16> to vector<384x128xbf16>
    %cst = arith.constant dense<0.000000e+00> : vector<128x128xf32>
    %6 = tpu.matmul %3, %5, %cst {dimension_numbers = #tpu.dot_dimension_numbers<[1], [0], [0], [1], [0, 0, 1, 1], [], []>} : vector<128x384xbf16>, vector<384x128xbf16>, vector<128x128xf32> -> vector<128x128xf32>
    %c0_5 = arith.constant 0 : index
    %c0_6 = arith.constant 0 : index
    %c0_7 = arith.constant 0 : index
    %7 = vector.load %arg7[%c0_5, %c0_6, %c0_7] : memref<1x128x128xf32, #tpu.memory_space<vmem>>, vector<1x128x128xf32>
    %8 = vector.shape_cast %7 : vector<1x128x128xf32> to vector<128x128xf32>
    %9 = arith.addf %8, %6 : vector<128x128xf32>
    %c0_8 = arith.constant 0 : index
    %c0_9 = arith.constant 0 : index
    %c0_10 = arith.constant 0 : index
    %10 = vector.load %arg7[%c0_8, %c0_9, %c0_10] : memref<1x128x128xf32, #tpu.memory_space<vmem>>, vector<1x128x128xf32>
    %11 = vector.shape_cast %10 : vector<1x128x128xf32> to vector<128x128xf32>
    %12 = vector.shape_cast %9 : vector<128x128xf32> to vector<1x128x128xf32>
    tpu.vector_store %arg7[%c0_8, %c0_9, %c0_10], %12 {strides = array<i32>} : memref<1x128x128xf32, #tpu.memory_space<vmem>>, vector<1x128x128xf32>,
    %c0_i32_11 = arith.constant 0 : i32
    %13 = arith.cmpi eq, %arg3, %c0_i32_11 : i32
    %14 = arith.extui %13 : i1 to i32
    %c0_i32_12 = arith.constant 0 : i32
    %15 = arith.cmpi ne, %14, %c0_i32_12 : i32
    scf.if %15 {
      %c0_13 = arith.constant 0 : index
      %c0_14 = arith.constant 0 : index
      %c0_15 = arith.constant 0 : index
      %16 = vector.load %arg7[%c0_13, %c0_14, %c0_15] : memref<1x128x128xf32, #tpu.memory_space<vmem>>, vector<1x128x128xf32>
      %17 = vector.shape_cast %16 : vector<1x128x128xf32> to vector<128x128xf32>
      %c0_16 = arith.constant 0 : index
      %c0_17 = arith.constant 0 : index
      %c0_18 = arith.constant 0 : index
      %18 = vector.load %arg6[%c0_16, %c0_17, %c0_18] : memref<1x1x128xf32, #tpu.memory_space<vmem>>, vector<1x1x128xf32>
      %19 = vector.shape_cast %18 : vector<1x1x128xf32> to vector<1x128xf32>
      %20 = vector.broadcast %19 : vector<1x128xf32> to vector<128x128xf32>
      %21 = arith.addf %17, %20 : vector<128x128xf32>
      %c0_19 = arith.constant 0 : index
      %c0_20 = arith.constant 0 : index
      %c0_21 = arith.constant 0 : index
      %22 = vector.load %arg7[%c0_19, %c0_20, %c0_21] : memref<1x128x128xf32, #tpu.memory_space<vmem>>, vector<1x128x128xf32>
      %23 = vector.shape_cast %22 : vector<1x128x128xf32> to vector<128x128xf32>
      %24 = vector.shape_cast %21 : vector<128x128xf32> to vector<1x128x128xf32>
      tpu.vector_store %arg7[%c0_19, %c0_20, %c0_21], %24 {strides = array<i32>} : memref<1x128x128xf32, #tpu.memory_space<vmem>>, vector<1x128x128xf32>,
    } else {
    }
    return
  }
  func.func @transform_0(%arg0: i32, %arg1: i32, %arg2: i32, %arg3: i32) -> (i32, i32) {
    %c0_i32 = arith.constant 0 : i32
    return %arg1, %arg3 : i32, i32
  }
  func.func @transform_1(%arg0: i32, %arg1: i32, %arg2: i32, %arg3: i32) -> (i32, i32, i32) {
    %c0_i32 = arith.constant 0 : i32
    return %arg0, %arg3, %arg2 : i32, i32, i32
  }
  func.func @transform_2(%arg0: i32, %arg1: i32, %arg2: i32, %arg3: i32) -> (i32, i32, i32) {
    %c0_i32 = arith.constant 0 : i32
    %c0_i32_0 = arith.constant 0 : i32
    return %arg0, %c0_i32, %arg2 : i32, i32, i32
  }
  func.func @transform_3(%arg0: i32, %arg1: i32, %arg2: i32, %arg3: i32) -> (i32, i32, i32) {
    %c0_i32 = arith.constant 0 : i32
    return %arg0, %arg1, %arg2 : i32, i32, i32
  }
}

</mosaic_0001>

<llo_original>
// kernel: tpu_custom_call.1
$region0: #{tpu_custom_call.1}
  #allocation0 [shape = 'u32[]', space=smem, size = 0x4, offset = 0x4, fixed_abs, tag = 'smem constant byte address 0x4 - core index']
  #allocation1 [shape = 'u32[144,128]{1,0:T(1,128)}', space=vmem, size = 0x12000, scoped, tag = 'internal scratch']
  %s0 = inlined_call_operand.hbm [shape: bf16[128,384], index: 0, kind: input, shape index: {}]
  %s1 = inlined_call_operand.hbm [shape: bf16[1,384,128], index: 1, kind: input, shape index: {}]
  %s2 = inlined_call_operand.vmem [shape: f32[1,1,128], index: 2, kind: input, shape index: {}]
  %s3 = inlined_call_operand.hbm [shape: f32[1,128,128], index: 3, kind: output, shape index: {}]
  %s4 = sld [smem:[#allocation0]]
  $region38: #{tpu_custom_call.1} parent=0
    _
  %s6 = ssub.s32 1, %s4
  %s7 = scalar_select 0, %s6, %s4
  $region1: #{tpu_custom_call.1} parent=0
    #allocation2 [shape = 'u8[98304]{0}', space=vmem, size = 0x18000, scoped, tag = 'input window, operand 0, single buffered']
    #allocation3 [shape = 's32[1]{0}', space=sflag, size = 0x4, scoped, tag = 'scoped memory for tpu_custom_call.1']
    #allocation4 [shape = 's32[1]{0}', space=sflag, size = 0x4, scoped, tag = 'scoped memory for tpu_custom_call.1']
    #allocation5 [shape = 'u8[98304]{0}', space=vmem, size = 0x18000, scoped, tag = 'input window, operand 1, single buffered']
    #allocation6 [shape = 's32[1]{0}', space=sflag, size = 0x4, scoped, tag = 'scoped memory for tpu_custom_call.1']
    #allocation7 [shape = 'u8[65536]{0}', space=vmem, size = 0x10000, scoped, tag = 'output window, operand 0, single buffered']
    %8 = vsyncpa [#allocation3], 0
    %9 = vsyncpa [#allocation6], 0
    %10 = vsyncpa [#allocation4], 0
    // Predicated region
    $region2: #{tpu_custom_call.1} parent=1 // pred_check
      _
    $region3: #{tpu_custom_call.1} parent=1 // pred_check_branch
      %12 = sbr.rel (0) target = $region5
    $region4: #{tpu_custom_call.1} parent=1 // pred_region
      %s14 = ssub.s32 3072, 3072
      %15 = vsyncadd [#allocation3], %s14
      %s16 = sshll.u32 [#allocation2], 4
      %s17 = int_to_ptr.vmem [resolvable:$true] %s16
      %22 = dma.hbm_to_vmem [thread:$0]  %s0, 3072, %s17, [#allocation3], 192, 192, 12
    $region5: #{tpu_custom_call.1} parent=1 // pred_fallthru
      _
    // Predicated region
    $region6: #{tpu_custom_call.1} parent=1 // pred_check
      _
    $region7: #{tpu_custom_call.1} parent=1 // pred_check_branch
      %24 = sbr.rel (0) target = $region9
    $region8: #{tpu_custom_call.1} parent=1 // pred_region
      %s26 = ssub.s32 3072, 3072
      %27 = vsyncadd [#allocation6], %s26
      %s28 = sshll.u32 [#allocation5], 4
      %s29 = int_to_ptr.vmem [resolvable:$true] %s28
      %34 = dma.hbm_to_vmem [thread:$0]  %s1, 3072, %s29, [#allocation6], 64, 64, 4
    $region9: #{tpu_custom_call.1} parent=1 // pred_fallthru
      _
    // Predicated region
    $region10: #{tpu_custom_call.1} parent=1 // pred_check
      _
    $region11: #{tpu_custom_call.1} parent=1 // pred_check_branch
      %36 = sbr.rel (0) target = $region13
    $region12: #{tpu_custom_call.1} parent=1 // pred_region
      _
    $region13: #{tpu_custom_call.1} parent=1 // pred_fallthru
      _
    // Predicated region
    $region14: #{tpu_custom_call.1} parent=1 // pred_check
      _
    $region15: #{tpu_custom_call.1} parent=1 // pred_check_branch
      %38 = sbr.rel (0) target = $region17
    $region16: #{tpu_custom_call.1} parent=1 // pred_region
      %39 = dma.done [#allocation3], 3072
    $region17: #{tpu_custom_call.1} parent=1 // pred_fallthru
      _
    // Predicated region
    $region18: #{tpu_custom_call.1} parent=1 // pred_check
      _
    $region19: #{tpu_custom_call.1} parent=1 // pred_check_branch
      %41 = sbr.rel (0) target = $region21
    $region20: #{tpu_custom_call.1} parent=1 // pred_region
      %42 = dma.done [#allocation6], 3072
    $region21: #{tpu_custom_call.1} parent=1 // pred_fallthru
      _
    %p44 = scmp.eq.s32.totalorder 0, 0
    // Predicated region
    $region22: #{tpu_custom_call.1} parent=1 // pred_check
      %p45 = pneg %p44
    $region23: #{tpu_custom_call.1} parent=1 // pred_check_branch
      %47 = sbr.rel (%p45) target = $region25
    $region24: #{tpu_custom_call.1} parent=1 // pred_region
      %48 = vst [vmem:[#allocation7] sm:$0xff] 0.0
      %49 = vst [vmem:[#allocation7 + $0x8] sm:$0xff] 0.0
      %50 = vst [vmem:[#allocation7 + $0x10] sm:$0xff] 0.0
      %51 = vst [vmem:[#allocation7 + $0x18] sm:$0xff] 0.0
      %52 = vst [vmem:[#allocation7 + $0x20] sm:$0xff] 0.0
      %53 = vst [vmem:[#allocation7 + $0x28] sm:$0xff] 0.0
      %54 = vst [vmem:[#allocation7 + $0x30] sm:$0xff] 0.0
      %55 = vst [vmem:[#allocation7 + $0x38] sm:$0xff] 0.0
      %56 = vst [vmem:[#allocation7 + $0x40] sm:$0xff] 0.0
      %57 = vst [vmem:[#allocation7 + $0x48] sm:$0xff] 0.0
      %58 = vst [vmem:[#allocation7 + $0x50] sm:$0xff] 0.0
      %59 = vst [vmem:[#allocation7 + $0x58] sm:$0xff] 0.0
      %60 = vst [vmem:[#allocation7 + $0x60] sm:$0xff] 0.0
      %61 = vst [vmem:[#allocation7 + $0x68] sm:$0xff] 0.0
      %62 = vst [vmem:[#allocation7 + $0x70] sm:$0xff] 0.0
      %63 = vst [vmem:[#allocation7 + $0x78] sm:$0xff] 0.0
    $region25: #{tpu_custom_call.1} parent=1 // pred_fallthru
      _
    %v64 = vld [vmem:[#allocation2] sm:$0xff]
    %v65 = vld [vmem:[#allocation2 + $0x8] sm:$0xf]
    %v66 = vld [vmem:[#allocation2 + $0xc] sm:$0xff]
    %v67 = vld [vmem:[#allocation2 + $0x14] sm:$0xf]
    %v68 = vld [vmem:[#allocation2 + $0x18] sm:$0xff]
    %v69 = vld [vmem:[#allocation2 + $0x20] sm:$0xf]
    %v70 = vld [vmem:[#allocation2 + $0x24] sm:$0xff]
    %v71 = vld [vmem:[#allocation2 + $0x2c] sm:$0xf]
    %v72 = vld [vmem:[#allocation2 + $0x30] sm:$0xff]
    %v73 = vld [vmem:[#allocation2 + $0x38] sm:$0xf]
    %v74 = vld [vmem:[#allocation2 + $0x3c] sm:$0xff]
    %v75 = vld [vmem:[#allocation2 + $0x44] sm:$0xf]
    %v76 = vld [vmem:[#allocation2 + $0x48] sm:$0xff]
    %v77 = vld [vmem:[#allocation2 + $0x50] sm:$0xf]
    %v78 = vld [vmem:[#allocation2 + $0x54] sm:$0xff]
    %v79 = vld [vmem:[#allocation2 + $0x5c] sm:$0xf]
    %v80 = vld [vmem:[#allocation2 + $0x60] sm:$0xff]
    %v81 = vld [vmem:[#allocation2 + $0x68] sm:$0xf]
    %v82 = vld [vmem:[#allocation2 + $0x6c] sm:$0xff]
    %v83 = vld [vmem:[#allocation2 + $0x74] sm:$0xf]
    %v84 = vld [vmem:[#allocation2 + $0x78] sm:$0xff]
    %v85 = vld [vmem:[#allocation2 + $0x80] sm:$0xf]
    %v86 = vld [vmem:[#allocation2 + $0x84] sm:$0xff]
    %v87 = vld [vmem:[#allocation2 + $0x8c] sm:$0xf]
    %v88 = vld [vmem:[#allocation2 + $0x90] sm:$0xff]
    %v89 = vld [vmem:[#allocation2 + $0x98] sm:$0xf]
    %v90 = vld [vmem:[#allocation2 + $0x9c] sm:$0xff]
    %v91 = vld [vmem:[#allocation2 + $0xa4] sm:$0xf]
    %v92 = vld [vmem:[#allocation2 + $0xa8] sm:$0xff]
    %v93 = vld [vmem:[#allocation2 + $0xb0] sm:$0xf]
    %v94 = vld [vmem:[#allocation2 + $0xb4] sm:$0xff]
    %v95 = vld [vmem:[#allocation2 + $0xbc] sm:$0xf]
    %v96 = vld [vmem:[#allocation5] sm:$0xf]
    %v97 = vld [vmem:[#allocation5 + $0x4] sm:$0xf]
    %v98 = vld [vmem:[#allocation5 + $0x8] sm:$0xf]
    %v99 = vld [vmem:[#allocation5 + $0xc] sm:$0xf]
    %v100 = vld [vmem:[#allocation5 + $0x10] sm:$0xf]
    %v101 = vld [vmem:[#allocation5 + $0x14] sm:$0xf]
    %v102 = vld [vmem:[#allocation5 + $0x18] sm:$0xf]
    %v103 = vld [vmem:[#allocation5 + $0x1c] sm:$0xf]
    %v104 = vld [vmem:[#allocation5 + $0x20] sm:$0xf]
    %v105 = vld [vmem:[#allocation5 + $0x24] sm:$0xf]
    %v106 = vld [vmem:[#allocation5 + $0x28] sm:$0xf]
    %v107 = vld [vmem:[#allocation5 + $0x2c] sm:$0xf]
    %v108 = vld [vmem:[#allocation5 + $0x30] sm:$0xf]
    %v109 = vld [vmem:[#allocation5 + $0x34] sm:$0xf]
    %v110 = vld [vmem:[#allocation5 + $0x38] sm:$0xf]
    %v111 = vld [vmem:[#allocation5 + $0x3c] sm:$0xf]
    %v112 = vld [vmem:[#allocation5 + $0x40] sm:$0xf]
    %v113 = vld [vmem:[#allocation5 + $0x44] sm:$0xf]
    %v114 = vld [vmem:[#allocation5 + $0x48] sm:$0xf]
    %v115 = vld [vmem:[#allocation5 + $0x4c] sm:$0xf]
    %v116 = vld [vmem:[#allocation5 + $0x50] sm:$0xf]
    %v117 = vld [vmem:[#allocation5 + $0x54] sm:$0xf]
    %v118 = vld [vmem:[#allocation5 + $0x58] sm:$0xf]
    %v119 = vld [vmem:[#allocation5 + $0x5c] sm:$0xf]
    %v120 = vld [vmem:[#allocation5 + $0x60] sm:$0xf]
    %v121 = vld [vmem:[#allocation5 + $0x64] sm:$0xf]
    %v122 = vld [vmem:[#allocation5 + $0x68] sm:$0xf]
    %v123 = vld [vmem:[#allocation5 + $0x6c] sm:$0xf]
    %v124 = vld [vmem:[#allocation5 + $0x70] sm:$0xf]
    %v125 = vld [vmem:[#allocation5 + $0x74] sm:$0xf]
    %v126 = vld [vmem:[#allocation5 + $0x78] sm:$0xf]
    %v127 = vld [vmem:[#allocation5 + $0x7c] sm:$0xf]
    %v128 = vld [vmem:[#allocation5 + $0x80] sm:$0xf]
    %v129 = vld [vmem:[#allocation5 + $0x84] sm:$0xf]
    %v130 = vld [vmem:[#allocation5 + $0x88] sm:$0xf]
    %v131 = vld [vmem:[#allocation5 + $0x8c] sm:$0xf]
    %v132 = vld [vmem:[#allocation5 + $0x90] sm:$0xf]
    %v133 = vld [vmem:[#allocation5 + $0x94] sm:$0xf]
    %v134 = vld [vmem:[#allocation5 + $0x98] sm:$0xf]
    %v135 = vld [vmem:[#allocation5 + $0x9c] sm:$0xf]
    %v136 = vld [vmem:[#allocation5 + $0xa0] sm:$0xf]
    %v137 = vld [vmem:[#allocation5 + $0xa4] sm:$0xf]
    %v138 = vld [vmem:[#allocation5 + $0xa8] sm:$0xf]
    %v139 = vld [vmem:[#allocation5 + $0xac] sm:$0xf]
    %v140 = vld [vmem:[#allocation5 + $0xb0] sm:$0xf]
    %v141 = vld [vmem:[#allocation5 + $0xb4] sm:$0xf]
    %v142 = vld [vmem:[#allocation5 + $0xb8] sm:$0xf]
    %v143 = vld [vmem:[#allocation5 + $0xbc] sm:$0xf]
    %v176 = vunpack.c.l.b16 %v64
    %v177 = vunpack.c.h.b16 %v64
    %v178 = vunpack.c.l.b16 %v65
    %v179 = vunpack.c.l.b16 %v66
    %v180 = vunpack.c.h.b16 %v66
    %v181 = vunpack.c.l.b16 %v67
    %v182 = vunpack.c.l.b16 %v68
    %v183 = vunpack.c.h.b16 %v68
    %v184 = vunpack.c.l.b16 %v69
    %v185 = vunpack.c.l.b16 %v70
    %v186 = vunpack.c.h.b16 %v70
    %v187 = vunpack.c.l.b16 %v71
    %v188 = vunpack.c.l.b16 %v72
    %v189 = vunpack.c.h.b16 %v72
    %v190 = vunpack.c.l.b16 %v73
    %v191 = vunpack.c.l.b16 %v74
    %v192 = vunpack.c.h.b16 %v74
    %v193 = vunpack.c.l.b16 %v75
    %v194 = vunpack.c.l.b16 %v76
    %v195 = vunpack.c.h.b16 %v76
    %v196 = vunpack.c.l.b16 %v77
    %v197 = vunpack.c.l.b16 %v78
    %v198 = vunpack.c.h.b16 %v78
    %v199 = vunpack.c.l.b16 %v79
    %v200 = vunpack.c.l.b16 %v80
    %v201 = vunpack.c.h.b16 %v80
    %v202 = vunpack.c.l.b16 %v81
    %v203 = vunpack.c.l.b16 %v82
    %v204 = vunpack.c.h.b16 %v82
    %v205 = vunpack.c.l.b16 %v83
    %v206 = vunpack.c.l.b16 %v84
    %v207 = vunpack.c.h.b16 %v84
    %v208 = vunpack.c.l.b16 %v85
    %v209 = vunpack.c.l.b16 %v86
    %v210 = vunpack.c.h.b16 %v86
    %v211 = vunpack.c.l.b16 %v87
    %v212 = vunpack.c.l.b16 %v88
    %v213 = vunpack.c.h.b16 %v88
    %v214 = vunpack.c.l.b16 %v89
    %v215 = vunpack.c.l.b16 %v90
    %v216 = vunpack.c.h.b16 %v90
    %v217 = vunpack.c.l.b16 %v91
    %v218 = vunpack.c.l.b16 %v92
    %v219 = vunpack.c.h.b16 %v92
    %v220 = vunpack.c.l.b16 %v93
    %v221 = vunpack.c.l.b16 %v94
    %v222 = vunpack.c.h.b16 %v94
    %v223 = vunpack.c.l.b16 %v95
    %v224 = vpack.c.b16 %v179, %v176
    %v225 = vpack.c.b16 %v180, %v177
    %v226 = vpack.c.b16 %v181, %v178
    %v227 = vpack.c.b16 %v185, %v182
    %v228 = vpack.c.b16 %v186, %v183
    %v229 = vpack.c.b16 %v187, %v184
    %v230 = vpack.c.b16 %v191, %v188
    %v231 = vpack.c.b16 %v192, %v189
    %v232 = vpack.c.b16 %v193, %v190
    %v233 = vpack.c.b16 %v197, %v194
    %v234 = vpack.c.b16 %v198, %v195
    %v235 = vpack.c.b16 %v199, %v196
    %v236 = vpack.c.b16 %v203, %v200
    %v237 = vpack.c.b16 %v204, %v201
    %v238 = vpack.c.b16 %v205, %v202
    %v239 = vpack.c.b16 %v209, %v206
    %v240 = vpack.c.b16 %v210, %v207
    %v241 = vpack.c.b16 %v211, %v208
    %v242 = vpack.c.b16 %v215, %v212
    %v243 = vpack.c.b16 %v216, %v213
    %v244 = vpack.c.b16 %v217, %v214
    %v245 = vpack.c.b16 %v221, %v218
    %v246 = vpack.c.b16 %v222, %v219
    %v247 = vpack.c.b16 %v223, %v220
    %v320 = vunpack.c.l.b16 %v96
    %v321 = vunpack.c.l.b16 %v97
    %v322 = vunpack.c.l.b16 %v98
    %v323 = vunpack.c.l.b16 %v99
    %v324 = vunpack.c.l.b16 %v100
    %v325 = vunpack.c.l.b16 %v101
    %v326 = vunpack.c.l.b16 %v102
    %v327 = vunpack.c.l.b16 %v103
    %v328 = vunpack.c.l.b16 %v104
    %v329 = vunpack.c.l.b16 %v105
    %v330 = vunpack.c.l.b16 %v106
    %v331 = vunpack.c.l.b16 %v107
    %v332 = vunpack.c.l.b16 %v108
    %v333 = vunpack.c.l.b16 %v109
    %v334 = vunpack.c.l.b16 %v110
    %v335 = vunpack.c.l.b16 %v111
    %v336 = vunpack.c.l.b16 %v112
    %v337 = vunpack.c.l.b16 %v113
    %v338 = vunpack.c.l.b16 %v114
    %v339 = vunpack.c.l.b16 %v115
    %v340 = vunpack.c.l.b16 %v116
    %v341 = vunpack.c.l.b16 %v117
    %v342 = vunpack.c.l.b16 %v118
    %v343 = vunpack.c.l.b16 %v119
    %v344 = vunpack.c.l.b16 %v120
    %v345 = vunpack.c.l.b16 %v121
    %v346 = vunpack.c.l.b16 %v122
    %v347 = vunpack.c.l.b16 %v123
    %v348 = vunpack.c.l.b16 %v124
    %v349 = vunpack.c.l.b16 %v125
    %v350 = vunpack.c.l.b16 %v126
    %v351 = vunpack.c.l.b16 %v127
    %v352 = vunpack.c.l.b16 %v128
    %v353 = vunpack.c.l.b16 %v129
    %v354 = vunpack.c.l.b16 %v130
    %v355 = vunpack.c.l.b16 %v131
    %v356 = vunpack.c.l.b16 %v132
    %v357 = vunpack.c.l.b16 %v133
    %v358 = vunpack.c.l.b16 %v134
    %v359 = vunpack.c.l.b16 %v135
    %v360 = vunpack.c.l.b16 %v136
    %v361 = vunpack.c.l.b16 %v137
    %v362 = vunpack.c.l.b16 %v138
    %v363 = vunpack.c.l.b16 %v139
    %v364 = vunpack.c.l.b16 %v140
    %v365 = vunpack.c.l.b16 %v141
    %v366 = vunpack.c.l.b16 %v142
    %v367 = vunpack.c.l.b16 %v143
    %v368 = vpack.c.b16 %v321, %v320
    %v369 = vpack.c.b16 %v323, %v322
    %v370 = vpack.c.b16 %v325, %v324
    %v371 = vpack.c.b16 %v327, %v326
    %v372 = vpack.c.b16 %v329, %v328
    %v373 = vpack.c.b16 %v331, %v330
    %v374 = vpack.c.b16 %v333, %v332
    %v375 = vpack.c.b16 %v335, %v334
    %v376 = vpack.c.b16 %v337, %v336
    %v377 = vpack.c.b16 %v339, %v338
    %v378 = vpack.c.b16 %v341, %v340
    %v379 = vpack.c.b16 %v343, %v342
    %v380 = vpack.c.b16 %v345, %v344
    %v381 = vpack.c.b16 %v347, %v346
    %v382 = vpack.c.b16 %v349, %v348
    %v383 = vpack.c.b16 %v351, %v350
    %v384 = vpack.c.b16 %v353, %v352
    %v385 = vpack.c.b16 %v355, %v354
    %v386 = vpack.c.b16 %v357, %v356
    %v387 = vpack.c.b16 %v359, %v358
    %v388 = vpack.c.b16 %v361, %v360
    %v389 = vpack.c.b16 %v363, %v362
    %v390 = vpack.c.b16 %v365, %v364
    %v391 = vpack.c.b16 %v367, %v366
    %416 = vmatprep.subr.bf16.mxu0 0
    %417 = vmatpush1.bf16.msra.mxu0 %v368
    %418 = vmatprep.subr.bf16.mxu0 0
    %419 = vmatpush1.bf16.msra.mxu0 %v369
    %420 = vmatprep.subr.bf16.mxu0 0
    %421 = vmatpush1.bf16.msra.mxu0 %v370
    %422 = vmatprep.subr.bf16.mxu0 0
    %423 = vmatpush1.bf16.msra.mxu0 %v371
    %424 = vmatprep.subr.bf16.mxu0 0
    %425 = vmatpush1.bf16.msra.mxu0 %v372
    %426 = vmatprep.subr.bf16.mxu0 0
    %427 = vmatpush1.bf16.msra.mxu0 %v373
    %428 = vmatprep.subr.bf16.mxu0 0
    %429 = vmatpush1.bf16.msra.mxu0 %v374
    %430 = vmatprep.subr.bf16.mxu0 0
    %431 = vmatpush1.bf16.msra.mxu0 %v375
    %432 = vmatprep.subr.bf16.mxu0 0
    %433 = vmatpush1.bf16.msra.mxu0 %v376
    %434 = vmatprep.subr.bf16.mxu0 0
    %435 = vmatpush1.bf16.msra.mxu0 %v377
    %436 = vmatprep.subr.bf16.mxu0 0
    %437 = vmatpush1.bf16.msra.mxu0 %v378
    %438 = vmatprep.subr.bf16.mxu0 0
    %439 = vmatpush1.bf16.msra.mxu0 %v379
    %440 = vmatprep.subr.bf16.mxu0 0
    %441 = vmatpush1.bf16.msra.mxu0 %v380
    %442 = vmatprep.subr.bf16.mxu0 0
    %443 = vmatpush1.bf16.msra.mxu0 %v381
    %444 = vmatprep.subr.bf16.mxu0 0
    %445 = vmatpush1.bf16.msra.mxu0 %v382
    %446 = vmatprep.subr.bf16.mxu0 0
    %447 = vmatpush1.bf16.msra.mxu0 %v383
    %448 = vmatprep.mubr.bf16.mxu0 %v225
    %449 = vmatmul.mubr.bf16.gmra.mrb[0].mxu0 %v224
    %v450 = vpop.f32.mrb[0].mxu0
    %v451 = vadd.f32 0.0, %v450
    %v452 = vpop.f32.mrb[0].mxu0
    %v453 = vpop.f32.mrb[0].mxu0
    %v454 = vadd.f32 0.0, %v453
    %v455 = vpop.f32.mrb[0].mxu0
    %456 = vmatprep.mubr.bf16.mxu0 %v228
    %457 = vmatmul.mubr.bf16.gmra.mrb[0].mxu0 %v227
    %v458 = vpop.f32.mrb[0].mxu0
    %v459 = vadd.f32 0.0, %v458
    %v460 = vpop.f32.mrb[0].mxu0
    %v461 = vpop.f32.mrb[0].mxu0
    %v462 = vadd.f32 0.0, %v461
    %v463 = vpop.f32.mrb[0].mxu0
    %464 = vmatprep.mubr.bf16.mxu0 %v231
    %465 = vmatmul.mubr.bf16.gmra.mrb[0].mxu0 %v230
    %v466 = vpop.f32.mrb[0].mxu0
    %v467 = vadd.f32 0.0, %v466
    %v468 = vpop.f32.mrb[0].mxu0
    %v469 = vpop.f32.mrb[0].mxu0
    %v470 = vadd.f32 0.0, %v469
    %v471 = vpop.f32.mrb[0].mxu0
    %472 = vmatprep.mubr.bf16.mxu0 %v234
    %473 = vmatmul.mubr.bf16.gmra.mrb[0].mxu0 %v233
    %v474 = vpop.f32.mrb[0].mxu0
    %v475 = vadd.f32 0.0, %v474
    %v476 = vpop.f32.mrb[0].mxu0
    %v477 = vpop.f32.mrb[0].mxu0
    %v478 = vadd.f32 0.0, %v477
    %v479 = vpop.f32.mrb[0].mxu0
    %480 = vmatprep.mubr.bf16.mxu0 %v237
    %481 = vmatmul.mubr.bf16.gmra.mrb[0].mxu0 %v236
    %v482 = vpop.f32.mrb[0].mxu0
    %v483 = vadd.f32 0.0, %v482
    %v484 = vpop.f32.mrb[0].mxu0
    %v485 = vpop.f32.mrb[0].mxu0
    %v486 = vadd.f32 0.0, %v485
    %v487 = vpop.f32.mrb[0].mxu0
    %488 = vmatprep.mubr.bf16.mxu0 %v240
    %489 = vmatmul.mubr.bf16.gmra.mrb[0].mxu0 %v239
    %v490 = vpop.f32.mrb[0].mxu0
    %v491 = vadd.f32 0.0, %v490
    %v492 = vpop.f32.mrb[0].mxu0
    %v493 = vpop.f32.mrb[0].mxu0
    %v494 = vadd.f32 0.0, %v493
    %v495 = vpop.f32.mrb[0].mxu0
    %496 = vmatprep.mubr.bf16.mxu0 %v243
    %497 = vmatmul.mubr.bf16.gmra.mrb[0].mxu0 %v242
    %v498 = vpop.f32.mrb[0].mxu0
    %v499 = vadd.f32 0.0, %v498
    %v500 = vpop.f32.mrb[0].mxu0
    %v501 = vpop.f32.mrb[0].mxu0
    %v502 = vadd.f32 0.0, %v501
    %v503 = vpop.f32.mrb[0].mxu0
    %504 = vmatprep.mubr.bf16.mxu0 %v246
    %505 = vmatmul.mubr.bf16.gmra.mrb[0].mxu0 %v245
    %v506 = vpop.f32.mrb[0].mxu0
    %v507 = vadd.f32 0.0, %v506
    %v508 = vpop.f32.mrb[0].mxu0
    %v509 = vpop.f32.mrb[0].mxu0
    %v510 = vadd.f32 0.0, %v509
    %v511 = vpop.f32.mrb[0].mxu0
    %512 = vdwg.mxu0
    %513 = vmatprep.subr.bf16.mxu0 0
    %514 = vmatpush1.bf16.msra.mxu0 %v384
    %515 = vmatprep.subr.bf16.mxu0 0
    %516 = vmatpush1.bf16.msra.mxu0 %v385
    %517 = vmatprep.subr.bf16.mxu0 0
    %518 = vmatpush1.bf16.msra.mxu0 %v386
    %519 = vmatprep.subr.bf16.mxu0 0
    %520 = vmatpush1.bf16.msra.mxu0 %v387
    %521 = vmatprep.subr.bf16.mxu0 0
    %522 = vmatpush1.bf16.msra.mxu0 %v388
    %523 = vmatprep.subr.bf16.mxu0 0
    %524 = vmatpush1.bf16.msra.mxu0 %v389
    %525 = vmatprep.subr.bf16.mxu0 0
    %526 = vmatpush1.bf16.msra.mxu0 %v390
    %527 = vmatprep.subr.bf16.mxu0 0
    %528 = vmatpush1.bf16.msra.mxu0 %v391
    %529 = vmatprep.subr.bf16.mxu0 0
    %530 = vmatpush1.bf16.msra.mxu0 0
    %531 = vmatprep.subr.bf16.mxu0 0
    %532 = vmatpush1.bf16.msra.mxu0 0
    %533 = vmatprep.subr.bf16.mxu0 0
    %534 = vmatpush1.bf16.msra.mxu0 0
    %535 = vmatprep.subr.bf16.mxu0 0
    %536 = vmatpush1.bf16.msra.mxu0 0
    %537 = vmatprep.subr.bf16.mxu0 0
    %538 = vmatpush1.bf16.msra.mxu0 0
    %539 = vmatprep.subr.bf16.mxu0 0
    %540 = vmatpush1.bf16.msra.mxu0 0
    %541 = vmatprep.subr.bf16.mxu0 0
    %542 = vmatpush1.bf16.msra.mxu0 0
    %543 = vmatprep.subr.bf16.mxu0 0
    %544 = vmatpush1.bf16.msra.mxu0 0
    %545 = vmatprep.mubr.bf16.mxu0 0
    %546 = vmatmul.mubr.bf16.gmra.mrb[0].mxu0 %v226
    %v547 = vpop.f32.mrb[0].mxu0
    %v548 = vadd.f32 %v451, %v547
    %v549 = vpop.f32.mrb[0].mxu0
    %v550 = vpop.f32.mrb[0].mxu0
    %v551 = vadd.f32 %v454, %v550
    %v552 = vpop.f32.mrb[0].mxu0
    %553 = vmatprep.mubr.bf16.mxu0 0
    %554 = vmatmul.mubr.bf16.gmra.mrb[0].mxu0 %v229
    %v555 = vpop.f32.mrb[0].mxu0
    %v556 = vadd.f32 %v459, %v555
    %v557 = vpop.f32.mrb[0].mxu0
    %v558 = vpop.f32.mrb[0].mxu0
    %v559 = vadd.f32 %v462, %v558
    %v560 = vpop.f32.mrb[0].mxu0
    %561 = vmatprep.mubr.bf16.mxu0 0
    %562 = vmatmul.mubr.bf16.gmra.mrb[0].mxu0 %v232
    %v563 = vpop.f32.mrb[0].mxu0
    %v564 = vadd.f32 %v467, %v563
    %v565 = vpop.f32.mrb[0].mxu0
    %v566 = vpop.f32.mrb[0].mxu0
    %v567 = vadd.f32 %v470, %v566
    %v568 = vpop.f32.mrb[0].mxu0
    %569 = vmatprep.mubr.bf16.mxu0 0
    %570 = vmatmul.mubr.bf16.gmra.mrb[0].mxu0 %v235
    %v571 = vpop.f32.mrb[0].mxu0
    %v572 = vadd.f32 %v475, %v571
    %v573 = vpop.f32.mrb[0].mxu0
    %v574 = vpop.f32.mrb[0].mxu0
    %v575 = vadd.f32 %v478, %v574
    %v576 = vpop.f32.mrb[0].mxu0
    %577 = vmatprep.mubr.bf16.mxu0 0
    %578 = vmatmul.mubr.bf16.gmra.mrb[0].mxu0 %v238
    %v579 = vpop.f32.mrb[0].mxu0
    %v580 = vadd.f32 %v483, %v579
    %v581 = vpop.f32.mrb[0].mxu0
    %v582 = vpop.f32.mrb[0].mxu0
    %v583 = vadd.f32 %v486, %v582
    %v584 = vpop.f32.mrb[0].mxu0
    %585 = vmatprep.mubr.bf16.mxu0 0
    %586 = vmatmul.mubr.bf16.gmra.mrb[0].mxu0 %v241
    %v587 = vpop.f32.mrb[0].mxu0
    %v588 = vadd.f32 %v491, %v587
    %v589 = vpop.f32.mrb[0].mxu0
    %v590 = vpop.f32.mrb[0].mxu0
    %v591 = vadd.f32 %v494, %v590
    %v592 = vpop.f32.mrb[0].mxu0
    %593 = vmatprep.mubr.bf16.mxu0 0
    %594 = vmatmul.mubr.bf16.gmra.mrb[0].mxu0 %v244
    %v595 = vpop.f32.mrb[0].mxu0
    %v596 = vadd.f32 %v499, %v595
    %v597 = vpop.f32.mrb[0].mxu0
    %v598 = vpop.f32.mrb[0].mxu0
    %v599 = vadd.f32 %v502, %v598
    %v600 = vpop.f32.mrb[0].mxu0
    %601 = vmatprep.mubr.bf16.mxu0 0
    %602 = vmatmul.mubr.bf16.gmra.mrb[0].mxu0 %v247
    %v603 = vpop.f32.mrb[0].mxu0
    %v604 = vadd.f32 %v507, %v603
    %v605 = vpop.f32.mrb[0].mxu0
    %v606 = vpop.f32.mrb[0].mxu0
    %v607 = vadd.f32 %v510, %v606
    %v608 = vpop.f32.mrb[0].mxu0
    %609 = vdwg.mxu0
    %v610 = vld [vmem:[#allocation7] sm:$0xff]
    %v611 = vld [vmem:[#allocation7 + $0x8] sm:$0xff]
    %v612 = vld [vmem:[#allocation7 + $0x10] sm:$0xff]
    %v613 = vld [vmem:[#allocation7 + $0x18] sm:$0xff]
    %v614 = vld [vmem:[#allocation7 + $0x20] sm:$0xff]
    %v615 = vld [vmem:[#allocation7 + $0x28] sm:$0xff]
    %v616 = vld [vmem:[#allocation7 + $0x30] sm:$0xff]
    %v617 = vld [vmem:[#allocation7 + $0x38] sm:$0xff]
    %v618 = vld [vmem:[#allocation7 + $0x40] sm:$0xff]
    %v619 = vld [vmem:[#allocation7 + $0x48] sm:$0xff]
    %v620 = vld [vmem:[#allocation7 + $0x50] sm:$0xff]
    %v621 = vld [vmem:[#allocation7 + $0x58] sm:$0xff]
    %v622 = vld [vmem:[#allocation7 + $0x60] sm:$0xff]
    %v623 = vld [vmem:[#allocation7 + $0x68] sm:$0xff]
    %v624 = vld [vmem:[#allocation7 + $0x70] sm:$0xff]
    %v625 = vld [vmem:[#allocation7 + $0x78] sm:$0xff]
    %v626 = vadd.f32 %v610, %v548
    %v627 = vadd.f32 %v611, %v551
    %v628 = vadd.f32 %v612, %v556
    %v629 = vadd.f32 %v613, %v559
    %v630 = vadd.f32 %v614, %v564
    %v631 = vadd.f32 %v615, %v567
    %v632 = vadd.f32 %v616, %v572
    %v633 = vadd.f32 %v617, %v575
    %v634 = vadd.f32 %v618, %v580
    %v635 = vadd.f32 %v619, %v583
    %v636 = vadd.f32 %v620, %v588
    %v637 = vadd.f32 %v621, %v591
    %v638 = vadd.f32 %v622, %v596
    %v639 = vadd.f32 %v623, %v599
    %v640 = vadd.f32 %v624, %v604
    %v641 = vadd.f32 %v625, %v607
    %642 = vst [vmem:[#allocation7] sm:$0xff] %v626
    %643 = vst [vmem:[#allocation7 + $0x8] sm:$0xff] %v627
    %644 = vst [vmem:[#allocation7 + $0x10] sm:$0xff] %v628
    %645 = vst [vmem:[#allocation7 + $0x18] sm:$0xff] %v629
    %646 = vst [vmem:[#allocation7 + $0x20] sm:$0xff] %v630
    %647 = vst [vmem:[#allocation7 + $0x28] sm:$0xff] %v631
    %648 = vst [vmem:[#allocation7 + $0x30] sm:$0xff] %v632
    %649 = vst [vmem:[#allocation7 + $0x38] sm:$0xff] %v633
    %650 = vst [vmem:[#allocation7 + $0x40] sm:$0xff] %v634
    %651 = vst [vmem:[#allocation7 + $0x48] sm:$0xff] %v635
    %652 = vst [vmem:[#allocation7 + $0x50] sm:$0xff] %v636
    %653 = vst [vmem:[#allocation7 + $0x58] sm:$0xff] %v637
    %654 = vst [vmem:[#allocation7 + $0x60] sm:$0xff] %v638
    %655 = vst [vmem:[#allocation7 + $0x68] sm:$0xff] %v639
    %656 = vst [vmem:[#allocation7 + $0x70] sm:$0xff] %v640
    %657 = vst [vmem:[#allocation7 + $0x78] sm:$0xff] %v641
    // Predicated region
    $region26: #{tpu_custom_call.1} parent=1 // pred_check
      %p658 = pneg %p44
    $region27: #{tpu_custom_call.1} parent=1 // pred_check_branch
      %660 = sbr.rel (%p658) target = $region29
    $region28: #{tpu_custom_call.1} parent=1 // pred_region
      %v661 = vld [vmem:[#allocation7] sm:$0xff]
      %v662 = vld [vmem:[#allocation7 + $0x8] sm:$0xff]
      %v663 = vld [vmem:[#allocation7 + $0x10] sm:$0xff]
      %v664 = vld [vmem:[#allocation7 + $0x18] sm:$0xff]
      %v665 = vld [vmem:[#allocation7 + $0x20] sm:$0xff]
      %v666 = vld [vmem:[#allocation7 + $0x28] sm:$0xff]
      %v667 = vld [vmem:[#allocation7 + $0x30] sm:$0xff]
      %v668 = vld [vmem:[#allocation7 + $0x38] sm:$0xff]
      %v669 = vld [vmem:[#allocation7 + $0x40] sm:$0xff]
      %v670 = vld [vmem:[#allocation7 + $0x48] sm:$0xff]
      %v671 = vld [vmem:[#allocation7 + $0x50] sm:$0xff]
      %v672 = vld [vmem:[#allocation7 + $0x58] sm:$0xff]
      %v673 = vld [vmem:[#allocation7 + $0x60] sm:$0xff]
      %v674 = vld [vmem:[#allocation7 + $0x68] sm:$0xff]
      %v675 = vld [vmem:[#allocation7 + $0x70] sm:$0xff]
      %v676 = vld [vmem:[#allocation7 + $0x78] sm:$0xff]
      %v677 = vld [vmem:[%s2] sm:$0x1]
      %v679 = vlaneseq
      %v680 = vshrl.u32 %v679, 7
      %v681 = vsub.s32 0, %v680
      %v682 = vrot.slane %v677, %v681
      %v684 = vadd.f32 %v661, %v682
      %v685 = vadd.f32 %v662, %v682
      %v686 = vadd.f32 %v663, %v682
      %v687 = vadd.f32 %v664, %v682
      %v688 = vadd.f32 %v665, %v682
      %v689 = vadd.f32 %v666, %v682
      %v690 = vadd.f32 %v667, %v682
      %v691 = vadd.f32 %v668, %v682
      %v692 = vadd.f32 %v669, %v682
      %v693 = vadd.f32 %v670, %v682
      %v694 = vadd.f32 %v671, %v682
      %v695 = vadd.f32 %v672, %v682
      %v696 = vadd.f32 %v673, %v682
      %v697 = vadd.f32 %v674, %v682
      %v698 = vadd.f32 %v675, %v682
      %v699 = vadd.f32 %v676, %v682
      %700 = vst [vmem:[#allocation7] sm:$0xff] %v684
      %701 = vst [vmem:[#allocation7 + $0x8] sm:$0xff] %v685
      %702 = vst [vmem:[#allocation7 + $0x10] sm:$0xff] %v686
      %703 = vst [vmem:[#allocation7 + $0x18] sm:$0xff] %v687
      %704 = vst [vmem:[#allocation7 + $0x20] sm:$0xff] %v688
      %705 = vst [vmem:[#allocation7 + $0x28] sm:$0xff] %v689
      %706 = vst [vmem:[#allocation7 + $0x30] sm:$0xff] %v690
      %707 = vst [vmem:[#allocation7 + $0x38] sm:$0xff] %v691
      %708 = vst [vmem:[#allocation7 + $0x40] sm:$0xff] %v692
      %709 = vst [vmem:[#allocation7 + $0x48] sm:$0xff] %v693
      %710 = vst [vmem:[#allocation7 + $0x50] sm:$0xff] %v694
      %711 = vst [vmem:[#allocation7 + $0x58] sm:$0xff] %v695
      %712 = vst [vmem:[#allocation7 + $0x60] sm:$0xff] %v696
      %713 = vst [vmem:[#allocation7 + $0x68] sm:$0xff] %v697
      %714 = vst [vmem:[#allocation7 + $0x70] sm:$0xff] %v698
      %715 = vst [vmem:[#allocation7 + $0x78] sm:$0xff] %v699
    $region29: #{tpu_custom_call.1} parent=1 // pred_fallthru
      _
    // Predicated region
    $region30: #{tpu_custom_call.1} parent=1 // pred_check
      _
    $region31: #{tpu_custom_call.1} parent=1 // pred_check_branch
      %717 = sbr.rel (0) target = $region33
    $region32: #{tpu_custom_call.1} parent=1 // pred_region
      %s719 = ssub.s32 2048, 2048
      %720 = vsyncadd [#allocation4], %s719
      %s721 = sshll.u32 [#allocation7], 4
      %s722 = int_to_ptr.vmem [resolvable:$true] %s721
      %727 = dma.vmem_to_hbm [thread:$0]  %s722, 2048, %s3, [#allocation4], 128, 128, 8
    $region33: #{tpu_custom_call.1} parent=1 // pred_fallthru
      _
    // Predicated region
    $region34: #{tpu_custom_call.1} parent=1 // pred_check
      _
    $region35: #{tpu_custom_call.1} parent=1 // pred_check_branch
      %729 = sbr.rel (0) target = $region37
    $region36: #{tpu_custom_call.1} parent=1 // pred_region
      %730 = dma.done [#allocation4], 2048
    $region37: #{tpu_custom_call.1} parent=1 // pred_fallthru
      _
    %731 = vsyncpa [#allocation3], 1
    %732 = vsyncpa [#allocation6], 1
    %733 = vsyncpa [#allocation4], 1

</llo_original>
